<compile_context>
chip_gen: v6e
topology: v6e:2x2x1
jax: 0.10.0
libtpu: 0.0.40
codegen_flags: <defaults>
</compile_context>

<pallas_src>
import functools

import jax
import jax.numpy as jnp
from jax import lax
from jax.experimental import pallas as pl
from jax.experimental.pallas import tpu as pltpu

LANE = 128
IGNORE_INDEX = -100
_STRIP = 32          # row-strip processed fully in vregs


def _cdiv(a, b):
    return -(-a // b)


def _ce2d_kernel(x_ref, t_ref, loss_out_ref, cnt_out_ref, loss_acc, cnt_acc, *,
                 n_classes, ignore_index, rows_valid, row_tile, strip):
    # x_ref : (C, row_tile, LANE)   logits (original dtype)
    # t_ref : (row_tile, LANE)      int32 targets
    i = pl.program_id(1)            # row-tile index (reduction axis)

    @pl.when(i == 0)
    def _init():
        loss_acc[...] = jnp.zeros_like(loss_acc)
        cnt_acc[...] = jnp.zeros_like(cnt_acc)

    need_row_mask = (rows_valid % row_tile) != 0   # static Python bool

    def process(off, size):
        tgt = t_ref[pl.ds(off, size), :]
        valid = tgt != ignore_index
        if need_row_mask:
            # Mask rows past the true row count (garbage from the partial
            # last block of a non-divisible grid).
            row_ids = (i * row_tile + off
                       + lax.broadcasted_iota(jnp.int32, (size, LANE), 0))
            valid = jnp.logical_and(valid, row_ids < rows_valid)

        # Pass 1: running max over the (small, unrolled) class axis.
        m = x_ref[0, pl.ds(off, size), :].astype(jnp.float32)
        for c in range(1, n_classes):
            m = jnp.maximum(m, x_ref[c, pl.ds(off, size), :].astype(jnp.float32))

        # Pass 2: sum of exponentials + target-class logit (select chain).
        sum_exp = jnp.zeros_like(m)
        tgt_logit = jnp.zeros_like(m)
        for c in range(n_classes):
            xc = x_ref[c, pl.ds(off, size), :].astype(jnp.float32)
            sum_exp = sum_exp + jnp.exp(xc - m)
            tgt_logit = jnp.where(tgt == c, xc, tgt_logit)

        lse = m + jnp.log(sum_exp)
        pix = jnp.where(valid, lse - tgt_logit, 0.0)

        loss_acc[pl.ds(off, size), :] += pix
        cnt_acc[pl.ds(off, size), :] += valid.astype(jnp.int32)

    n_full = row_tile // strip
    tail = row_tile - n_full * strip

    def body(s, carry):
        off = pl.multiple_of(s * strip, strip)
        process(off, strip)
        return carry

    lax.fori_loop(0, n_full, body, 0)
    if tail:                         # static remainder strip
        process(n_full * strip, tail)

    @pl.when(i == pl.num_programs(1) - 1)
    def _finalize():
        loss_out_ref[...] = jnp.reshape(jnp.sum(loss_acc[...]), (1, 1, 1))
        cnt_out_ref[...] = jnp.reshape(jnp.sum(cnt_acc[...]), (1, 1, 1))


def cross_entropy_loss_2d(logits, targets, ignore_index=IGNORE_INDEX,
                          row_tile=None):
    """Pallas implementation of CrossEntropyLoss2d.forward (scalar f32).

    logits : (N, C, H, W) float32 or bfloat16
    targets: (N, 1, H, W) or (N, H, W) integer class indices in [0, C) or
             ignore_index (targets >= C are assumed not to occur).
    """
    if targets.ndim == 4:
        targets = jnp.squeeze(targets, axis=1)   # mirrors .squeeze(1)
    N, C, H, W = logits.shape
    assert targets.shape == (N, H, W)

    P = H * W
    rows = _cdiv(P, LANE)
    p_pad = rows * LANE

    # Layout: (N, C, H, W) -> (N, C, rows, LANE); free reshape when
    # H*W % 128 == 0, otherwise one small pad (masked via ignore_index).
    x = logits.reshape(N, C, P)
    t = targets.astype(jnp.int32).reshape(N, P)
    if p_pad != P:
        x = jnp.pad(x, ((0, 0), (0, 0), (0, p_pad - P)))
        t = jnp.pad(t, ((0, 0), (0, p_pad - P)),
                    constant_values=int(ignore_index))
    x = x.reshape(N, C, rows, LANE)
    t = t.reshape(N, rows, LANE)

    itemsize = x.dtype.itemsize

    # Generation-aware VMEM budget (v5e/v6e: 128 MiB phys, v7x: 64 MiB/TC).
    phys_vmem = 64 * 1024 * 1024
    try:
        info = pltpu.get_tpu_info()
        phys_vmem = int(getattr(info, "vmem_capacity_bytes", phys_vmem))
    except Exception:
        pass
    vmem_limit = int(min(40 * 1024 * 1024, (phys_vmem * 3) // 4))
    budget = (vmem_limit * 3) // 4
    # double-buffered logits + double-buffered targets + 2 accumulators
    bytes_per_row = LANE * (2 * C * itemsize + 2 * 4 + 2 * 4)
    cap_rows = max(_STRIP, (budget // bytes_per_row) // _STRIP * _STRIP)

    if row_tile is None:
        row_tile = 4096
    row_tile = min(int(row_tile), cap_rows)
    if row_tile >= rows:
        row_tile = rows                                  # single full-extent block
    else:
        row_tile = max(_STRIP, (row_tile // _STRIP) * _STRIP)  # ok for f32/bf16 tiling
    grid_rows = _cdiv(rows, row_tile)
    strip = min(_STRIP, row_tile)

    kernel = functools.partial(
        _ce2d_kernel, n_classes=C, ignore_index=int(ignore_index),
        rows_valid=rows, row_tile=row_tile, strip=strip)

    loss_sums, cnt_sums = pl.pallas_call(
        kernel,
        out_shape=(jax.ShapeDtypeStruct((N, 1, 1), jnp.float32),
                   jax.ShapeDtypeStruct((N, 1, 1), jnp.int32)),
        grid_spec=pltpu.PrefetchScalarGridSpec(
            num_scalar_prefetch=0,
            grid=(N, grid_rows),
            in_specs=[
                pl.BlockSpec((None, C, row_tile, LANE),
                             lambda n, i: (n, 0, i, 0)),
                pl.BlockSpec((None, row_tile, LANE),
                             lambda n, i: (n, i, 0)),
            ],
            out_specs=(
                pl.BlockSpec((1, 1, 1), lambda n, i: (n, 0, 0)),
                pl.BlockSpec((1, 1, 1), lambda n, i: (n, 0, 0)),
            ),
            scratch_shapes=[
                pltpu.VMEM((row_tile, LANE), jnp.float32),   # loss sum
                pltpu.VMEM((row_tile, LANE), jnp.int32),     # valid count
            ],
        ),
        compiler_params=pltpu.CompilerParams(
            dimension_semantics=("parallel", "arbitrary"),
            vmem_limit_bytes=vmem_limit),
    )(x, t)

    total_loss = jnp.sum(loss_sums)
    total_cnt = jnp.sum(cnt_sums).astype(jnp.float32)
    # Matches PyTorch 'mean' reduction: NaN when there are no valid pixels.
    return total_loss / total_cnt


def cross_entropy_loss_2d_ref(logits, targets, ignore_index=IGNORE_INDEX):
    """Pure-JAX reference mirroring torch.nn.CrossEntropyLoss (mean)."""
    if targets.ndim == 4:
        targets = jnp.squeeze(targets, axis=1)
    logp = jax.nn.log_softmax(logits.astype(jnp.float32), axis=1)
    valid = targets != ignore_index
    safe_t = jnp.where(valid, targets, 0).astype(jnp.int32)
    gathered = jnp.take_along_axis(logp, safe_t[:, None, :, :], axis=1)[:, 0]
    losses = jnp.where(valid, -gathered, 0.0)
    return jnp.sum(losses) / jnp.sum(valid)


if __name__ == "__main__":
    key = jax.random.PRNGKey(0)
    k1, k2, k3, k4, k5, k6 = jax.random.split(key, 6)

    # Case 1: small NCHW, targets (N,1,H,W) as the PyTorch module expects,
    # with ignore_index pixels. H*W is a multiple of 128 -> zero-copy path.
    B, C, H, W = 2, 4, 16, 16
    logits = jax.random.normal(k1, (B, C, H, W), dtype=jnp.float32)
    targets = jax.random.randint(k2, (B, 1, H, W), 0, C)
    targets = targets.at[0, 0, 0, 0].set(IGNORE_INDEX)
    targets = targets.at[1, 0, 3, 7].set(IGNORE_INDEX)
    loss = jax.block_until_ready(cross_entropy_loss_2d(logits, targets))
    ref = cross_entropy_loss_2d_ref(logits, targets)
    assert jnp.allclose(loss, ref, rtol=1e-5, atol=1e-6), (loss, ref)

    # Case 2: H*W not a multiple of 128 (small pad path) + bf16 logits.
    B2, C2, H2, W2 = 2, 5, 24, 24
    logits2 = jax.random.normal(k3, (B2, C2, H2, W2)).astype(jnp.bfloat16)
    targets2 = jax.random.randint(k4, (B2, 1, H2, W2), 0, C2)
    targets2 = targets2.at[0, 0, 5, 5].set(IGNORE_INDEX)
    loss2 = jax.block_until_ready(cross_entropy_loss_2d(logits2, targets2))
    ref2 = cross_entropy_loss_2d_ref(logits2, targets2)
    assert jnp.allclose(loss2, ref2, rtol=5e-3, atol=5e-3), (loss2, ref2)

    # Case 3: forced small row_tile so the reduction grid has several steps
    # including a partial (index-masked) last tile. rows = 72 -> tiles 32/32/8.
    B3, C3, H3, W3 = 2, 4, 96, 96
    logits3 = jax.random.normal(k5, (B3, C3, H3, W3), dtype=jnp.float32)
    targets3 = jax.random.randint(k6, (B3, 1, H3, W3), 0, C3)
    loss3 = jax.block_until_ready(
        cross_entropy_loss_2d(logits3, targets3, row_tile=32))
    ref3 = cross_entropy_loss_2d_ref(logits3, targets3)
    assert jnp.allclose(loss3, ref3, rtol=1e-5, atol=1e-6), (loss3, ref3)

    print("KERNEL_OK")
</pallas_src>

<mosaic_0001>
module attributes {stable_mosaic.version = 11 : i64} {
  func.func @_ce2d_kernel(%arg0: i32, %arg1: i32, %arg2: memref<1x4x2x128xf32, #tpu.memory_space<vmem>>, %arg3: memref<1x2x128xi32, #tpu.memory_space<vmem>>, %arg4: memref<1x1x1xf32, #tpu.memory_space<vmem>>, %arg5: memref<1x1x1xi32, #tpu.memory_space<vmem>>, %arg6: memref<2x128xf32, #tpu.memory_space<vmem>>, %arg7: memref<2x128xi32, #tpu.memory_space<vmem>>) attributes {dimension_semantics = [#tpu.dimension_semantics<parallel>, #tpu.dimension_semantics<arbitrary>], iteration_bounds = array<i64: 2, 1>, scalar_prefetch = 0 : i64, scratch_operands = 2 : i64, tpu.core_type = #tpu.core_type<tc>, window_params = [{transform_indices = @transform_0, window_bounds = array<i64: 1, 4, 2, 128>}, {transform_indices = @transform_1, window_bounds = array<i64: 1, 2, 128>}, {transform_indices = @transform_2, window_bounds = array<i64: 1, 1, 1>}, {transform_indices = @transform_3, window_bounds = array<i64: 1, 1, 1>}]} {
    %c0_i32 = arith.constant 0 : i32
    %0 = arith.cmpi eq, %arg1, %c0_i32 : i32
    %1 = arith.extui %0 : i1 to i32
    %c0_i32_0 = arith.constant 0 : i32
    %2 = arith.cmpi ne, %1, %c0_i32_0 : i32
    scf.if %2 {
      %cst_35 = arith.constant 0.000000e+00 : f32
      %82 = vector.broadcast %cst_35 : f32 to vector<2x128xf32>
      %c0_36 = arith.constant 0 : index
      %c0_37 = arith.constant 0 : index
      %83 = vector.load %arg6[%c0_36, %c0_37] : memref<2x128xf32, #tpu.memory_space<vmem>>, vector<2x128xf32>
      tpu.vector_store %arg6[%c0_36, %c0_37], %82 {strides = array<i32>} : memref<2x128xf32, #tpu.memory_space<vmem>>, vector<2x128xf32>,
      %c0_i32_38 = arith.constant 0 : i32
      %84 = vector.broadcast %c0_i32_38 : i32 to vector<2x128xi32>
      %c0_39 = arith.constant 0 : index
      %c0_40 = arith.constant 0 : index
      %85 = vector.load %arg7[%c0_39, %c0_40] : memref<2x128xi32, #tpu.memory_space<vmem>>, vector<2x128xi32>
      tpu.vector_store %arg7[%c0_39, %c0_40], %84 {strides = array<i32>} : memref<2x128xi32, #tpu.memory_space<vmem>>, vector<2x128xi32>,
    } else {
    }
    %c0_i32_1 = arith.constant 0 : i32
    %c2_i32 = arith.constant 2 : i32
    %3 = arith.muli %c0_i32_1, %c2_i32 : i32
    %4 = tpu.assume_multiple %3, 2 : i32
    %c0 = arith.constant 0 : index
    %5 = arith.index_cast %4 : i32 to index
    %c0_2 = arith.constant 0 : index
    %6 = vector.load %arg3[%c0, %5, %c0_2] : memref<1x2x128xi32, #tpu.memory_space<vmem>>, vector<1x2x128xi32>
    %7 = vector.shape_cast %6 : vector<1x2x128xi32> to vector<2x128xi32>
    %c-100_i32 = arith.constant -100 : i32
    %8 = vector.broadcast %c-100_i32 : i32 to vector<2x128xi32>
    %9 = arith.cmpi ne, %7, %8 : vector<2x128xi32>
    %c0_3 = arith.constant 0 : index
    %c0_4 = arith.constant 0 : index
    %10 = arith.index_cast %4 : i32 to index
    %c0_5 = arith.constant 0 : index
    %11 = vector.load %arg2[%c0_3, %c0_4, %10, %c0_5] : memref<1x4x2x128xf32, #tpu.memory_space<vmem>>, vector<1x1x2x128xf32>
    %12 = vector.shape_cast %11 : vector<1x1x2x128xf32> to vector<2x128xf32>
    %c0_6 = arith.constant 0 : index
    %c1 = arith.constant 1 : index
    %13 = arith.index_cast %4 : i32 to index
    %c0_7 = arith.constant 0 : index
    %14 = vector.load %arg2[%c0_6, %c1, %13, %c0_7] : memref<1x4x2x128xf32, #tpu.memory_space<vmem>>, vector<1x1x2x128xf32>
    %15 = vector.shape_cast %14 : vector<1x1x2x128xf32> to vector<2x128xf32>
    %16 = arith.maximumf %12, %15 : vector<2x128xf32>
    %c0_8 = arith.constant 0 : index
    %c2 = arith.constant 2 : index
    %17 = arith.index_cast %4 : i32 to index
    %c0_9 = arith.constant 0 : index
    %18 = vector.load %arg2[%c0_8, %c2, %17, %c0_9] : memref<1x4x2x128xf32, #tpu.memory_space<vmem>>, vector<1x1x2x128xf32>
    %19 = vector.shape_cast %18 : vector<1x1x2x128xf32> to vector<2x128xf32>
    %20 = arith.maximumf %16, %19 : vector<2x128xf32>
    %c0_10 = arith.constant 0 : index
    %c3 = arith.constant 3 : index
    %21 = arith.index_cast %4 : i32 to index
    %c0_11 = arith.constant 0 : index
    %22 = vector.load %arg2[%c0_10, %c3, %21, %c0_11] : memref<1x4x2x128xf32, #tpu.memory_space<vmem>>, vector<1x1x2x128xf32>
    %23 = vector.shape_cast %22 : vector<1x1x2x128xf32> to vector<2x128xf32>
    %24 = arith.maximumf %20, %23 : vector<2x128xf32>
    %cst = arith.constant 0.000000e+00 : f32
    %25 = vector.broadcast %cst : f32 to vector<2x128xf32>
    %cst_12 = arith.constant 0.000000e+00 : f32
    %26 = vector.broadcast %cst_12 : f32 to vector<2x128xf32>
    %c0_13 = arith.constant 0 : index
    %c0_14 = arith.constant 0 : index
    %27 = arith.index_cast %4 : i32 to index
    %c0_15 = arith.constant 0 : index
    %28 = vector.load %arg2[%c0_13, %c0_14, %27, %c0_15] : memref<1x4x2x128xf32, #tpu.memory_space<vmem>>, vector<1x1x2x128xf32>
    %29 = vector.shape_cast %28 : vector<1x1x2x128xf32> to vector<2x128xf32>
    %30 = arith.subf %29, %24 : vector<2x128xf32>
    %31 = math.exp %30 : vector<2x128xf32>
    %32 = arith.addf %25, %31 : vector<2x128xf32>
    %c0_i32_16 = arith.constant 0 : i32
    %33 = vector.broadcast %c0_i32_16 : i32 to vector<2x128xi32>
    %34 = arith.cmpi eq, %7, %33 : vector<2x128xi32>
    %35 = arith.select %34, %29, %26 : vector<2x128xi1>, vector<2x128xf32>
    %c0_17 = arith.constant 0 : index
    %c1_18 = arith.constant 1 : index
    %36 = arith.index_cast %4 : i32 to index
    %c0_19 = arith.constant 0 : index
    %37 = vector.load %arg2[%c0_17, %c1_18, %36, %c0_19] : memref<1x4x2x128xf32, #tpu.memory_space<vmem>>, vector<1x1x2x128xf32>
    %38 = vector.shape_cast %37 : vector<1x1x2x128xf32> to vector<2x128xf32>
    %39 = arith.subf %38, %24 : vector<2x128xf32>
    %40 = math.exp %39 : vector<2x128xf32>
    %41 = arith.addf %32, %40 : vector<2x128xf32>
    %c1_i32 = arith.constant 1 : i32
    %42 = vector.broadcast %c1_i32 : i32 to vector<2x128xi32>
    %43 = arith.cmpi eq, %7, %42 : vector<2x128xi32>
    %44 = arith.select %43, %38, %35 : vector<2x128xi1>, vector<2x128xf32>
    %c0_20 = arith.constant 0 : index
    %c2_21 = arith.constant 2 : index
    %45 = arith.index_cast %4 : i32 to index
    %c0_22 = arith.constant 0 : index
    %46 = vector.load %arg2[%c0_20, %c2_21, %45, %c0_22] : memref<1x4x2x128xf32, #tpu.memory_space<vmem>>, vector<1x1x2x128xf32>
    %47 = vector.shape_cast %46 : vector<1x1x2x128xf32> to vector<2x128xf32>
    %48 = arith.subf %47, %24 : vector<2x128xf32>
    %49 = math.exp %48 : vector<2x128xf32>
    %50 = arith.addf %41, %49 : vector<2x128xf32>
    %c2_i32_23 = arith.constant 2 : i32
    %51 = vector.broadcast %c2_i32_23 : i32 to vector<2x128xi32>
    %52 = arith.cmpi eq, %7, %51 : vector<2x128xi32>
    %53 = arith.select %52, %47, %44 : vector<2x128xi1>, vector<2x128xf32>
    %c0_24 = arith.constant 0 : index
    %c3_25 = arith.constant 3 : index
    %54 = arith.index_cast %4 : i32 to index
    %c0_26 = arith.constant 0 : index
    %55 = vector.load %arg2[%c0_24, %c3_25, %54, %c0_26] : memref<1x4x2x128xf32, #tpu.memory_space<vmem>>, vector<1x1x2x128xf32>
    %56 = vector.shape_cast %55 : vector<1x1x2x128xf32> to vector<2x128xf32>
    %57 = arith.subf %56, %24 : vector<2x128xf32>
    %58 = math.exp %57 : vector<2x128xf32>
    %59 = arith.addf %50, %58 : vector<2x128xf32>
    %c3_i32 = arith.constant 3 : i32
    %60 = vector.broadcast %c3_i32 : i32 to vector<2x128xi32>
    %61 = arith.cmpi eq, %7, %60 : vector<2x128xi32>
    %62 = arith.select %61, %56, %53 : vector<2x128xi1>, vector<2x128xf32>
    %63 = math.log %59 : vector<2x128xf32>
    %64 = arith.addf %24, %63 : vector<2x128xf32>
    %65 = arith.subf %64, %62 : vector<2x128xf32>
    %cst_27 = arith.constant 0.000000e+00 : f32
    %66 = vector.broadcast %cst_27 : f32 to vector<2x128xf32>
    %67 = arith.select %9, %65, %66 : vector<2x128xi1>, vector<2x128xf32>
    %68 = arith.index_cast %4 : i32 to index
    %c0_28 = arith.constant 0 : index
    %69 = vector.load %arg6[%68, %c0_28] : memref<2x128xf32, #tpu.memory_space<vmem>>, vector<2x128xf32>
    %70 = arith.addf %69, %67 : vector<2x128xf32>
    %71 = arith.index_cast %4 : i32 to index
    %c0_29 = arith.constant 0 : index
    %72 = vector.load %arg6[%71, %c0_29] : memref<2x128xf32, #tpu.memory_space<vmem>>, vector<2x128xf32>
    tpu.vector_store %arg6[%71, %c0_29], %70 {strides = array<i32>} : memref<2x128xf32, #tpu.memory_space<vmem>>, vector<2x128xf32>,
    %73 = arith.index_cast %4 : i32 to index
    %c0_30 = arith.constant 0 : index
    %74 = vector.load %arg7[%73, %c0_30] : memref<2x128xi32, #tpu.memory_space<vmem>>, vector<2x128xi32>
    %75 = arith.extui %9 : vector<2x128xi1> to vector<2x128xi32>
    %76 = arith.addi %74, %75 : vector<2x128xi32>
    %77 = arith.index_cast %4 : i32 to index
    %c0_31 = arith.constant 0 : index
    %78 = vector.load %arg7[%77, %c0_31] : memref<2x128xi32, #tpu.memory_space<vmem>>, vector<2x128xi32>
    tpu.vector_store %arg7[%77, %c0_31], %76 {strides = array<i32>} : memref<2x128xi32, #tpu.memory_space<vmem>>, vector<2x128xi32>,
    %c1_i32_32 = arith.constant 1 : i32
    %c0_i32_33 = arith.constant 0 : i32
    %79 = arith.cmpi eq, %arg1, %c0_i32_33 : i32
    %80 = arith.extui %79 : i1 to i32
    %c0_i32_34 = arith.constant 0 : i32
    %81 = arith.cmpi ne, %80, %c0_i32_34 : i32
    scf.if %81 {
      %c0_35 = arith.constant 0 : index
      %c0_36 = arith.constant 0 : index
      %82 = vector.load %arg6[%c0_35, %c0_36] : memref<2x128xf32, #tpu.memory_space<vmem>>, vector<2x128xf32>
      %83 = vector.shape_cast %82 : vector<2x128xf32> to vector<1x2x128xf32>
      %cst_37 = arith.constant dense<0.000000e+00> : vector<1xf32>
      %84 = vector.multi_reduction <add>, %83, %cst_37 [1, 2] : vector<1x2x128xf32> to vector<1xf32>
      %85 = vector.shape_cast %84 : vector<1xf32> to vector<1x1x1xf32>
      %86 = vector.extract %85[0, 0, 0] : f32 from vector<1x1x1xf32>
      %87 = vector.broadcast %86 : f32 to vector<1x1x1xf32>
      %c0_38 = arith.constant 0 : index
      %c0_39 = arith.constant 0 : index
      %c0_40 = arith.constant 0 : index
      %88 = vector.load %arg4[%c0_38, %c0_39, %c0_40] : memref<1x1x1xf32, #tpu.memory_space<vmem>>, vector<1x1x1xf32>
      tpu.vector_store %arg4[%c0_38, %c0_39, %c0_40], %87 {strides = array<i32>} : memref<1x1x1xf32, #tpu.memory_space<vmem>>, vector<1x1x1xf32>,
      %c0_41 = arith.constant 0 : index
      %c0_42 = arith.constant 0 : index
      %89 = vector.load %arg7[%c0_41, %c0_42] : memref<2x128xi32, #tpu.memory_space<vmem>>, vector<2x128xi32>
      %90 = vector.shape_cast %89 : vector<2x128xi32> to vector<1x2x128xi32>
      %cst_43 = arith.constant dense<0> : vector<1xi32>
      %91 = vector.multi_reduction <add>, %90, %cst_43 [1, 2] : vector<1x2x128xi32> to vector<1xi32>
      %92 = vector.shape_cast %91 : vector<1xi32> to vector<1x1x1xi32>
      %93 = vector.extract %92[0, 0, 0] : i32 from vector<1x1x1xi32>
      %94 = vector.broadcast %93 : i32 to vector<1x1x1xi32>
      %c0_44 = arith.constant 0 : index
      %c0_45 = arith.constant 0 : index
      %c0_46 = arith.constant 0 : index
      %95 = vector.load %arg5[%c0_44, %c0_45, %c0_46] : memref<1x1x1xi32, #tpu.memory_space<vmem>>, vector<1x1x1xi32>
      tpu.vector_store %arg5[%c0_44, %c0_45, %c0_46], %94 {strides = array<i32>} : memref<1x1x1xi32, #tpu.memory_space<vmem>>, vector<1x1x1xi32>,
    } else {
    }
    return
  }
  func.func @transform_0(%arg0: i32, %arg1: i32) -> (i32, i32, i32, i32) {
    %c0_i32 = arith.constant 0 : i32
    %c0_i32_0 = arith.constant 0 : i32
    %c0_i32_1 = arith.constant 0 : i32
    return %arg0, %c0_i32, %arg1, %c0_i32_0 : i32, i32, i32, i32
  }
  func.func @transform_1(%arg0: i32, %arg1: i32) -> (i32, i32, i32) {
    %c0_i32 = arith.constant 0 : i32
    %c0_i32_0 = arith.constant 0 : i32
    return %arg0, %arg1, %c0_i32 : i32, i32, i32
  }
  func.func @transform_2(%arg0: i32, %arg1: i32) -> (i32, i32, i32) {
    %c0_i32 = arith.constant 0 : i32
    %c0_i32_0 = arith.constant 0 : i32
    %c0_i32_1 = arith.constant 0 : i32
    return %arg0, %c0_i32, %c0_i32_0 : i32, i32, i32
  }
  func.func @transform_3(%arg0: i32, %arg1: i32) -> (i32, i32, i32) {
    %c0_i32 = arith.constant 0 : i32
    %c0_i32_0 = arith.constant 0 : i32
    %c0_i32_1 = arith.constant 0 : i32
    return %arg0, %c0_i32, %c0_i32_0 : i32, i32, i32
  }
}

</mosaic_0001>

<llo_original>
// kernel: tpu_custom_call.1
$region0: #{tpu_custom_call.1}
  #allocation0 [shape = 'u32[]', space=smem, size = 0x4, offset = 0x4, fixed_abs, tag = 'smem constant byte address 0x4 - core index']
  #allocation1 [shape = 'u32[144,128]{1,0:T(1,128)}', space=vmem, size = 0x12000, scoped, tag = 'internal scratch']
  #allocation2 [shape = 'f32[2,128]{1,0:T(2,128)}', space=vmem, size = 0x400, scoped, tag = 'scratch operand']
  #allocation3 [shape = 's32[2,128]{1,0:T(2,128)}', space=vmem, size = 0x400, scoped, tag = 'scratch operand']
  %s0 = inlined_call_operand.hbm [shape: f32[2,4,2,128], index: 0, kind: input, shape index: {}]
  %s1 = inlined_call_operand.hbm [shape: s32[2,2,128], index: 1, kind: input, shape index: {}]
  %s2 = inlined_call_operand.vmem [shape: f32[2,1,1], index: 2, kind: output, shape index: {0}]
  %s3 = inlined_call_operand.vmem [shape: s32[2,1,1], index: 3, kind: output, shape index: {1}]
  %4 = xla_tuple %s2, %s3
  %s5 = sld [smem:[#allocation0]]
  $region65: #{tpu_custom_call.1} parent=0
    _
  %s7 = ssub.s32 1, %s5
  %s8 = scalar_select 0, %s7, %s5
  $region1: #{tpu_custom_call.1} parent=0
    #allocation4 [shape = 'u8[8192]{0}', space=vmem, size = 0x2000, scoped, tag = 'input window, operand 0']
    #allocation5 [shape = 's32[2]{0}', space=sflag, size = 0x8, scoped, tag = 'scoped memory for tpu_custom_call.1']
    #allocation6 [shape = 'u8[2048]{0}', space=vmem, size = 0x800, scoped, tag = 'input window, operand 1']
    #allocation7 [shape = 's32[2]{0}', space=sflag, size = 0x8, scoped, tag = 'scoped memory for tpu_custom_call.1']
    %9 = vsyncpa [#allocation5], 0
    %s10 = scalar_lea.sflag [#allocation5], 1
    %11 = vsyncpa %s10, 0
    %12 = vsyncpa [#allocation7], 0
    %s13 = scalar_lea.sflag [#allocation7], 1
    %14 = vsyncpa %s13, 0
    loop: start=0, step=1, limit=4
    $region2: #{tpu_custom_call.1} parent=1 // loop_pre_header
      _
    $region3: #{tpu_custom_call.1} parent=1 // loop_header
      %s16 = sphi 0, %s20
      %p17 = scmp.ge.s32.totalorder %s16, 4
      %s23 = sphi 0, %s35
      %s24 = sphi 0, %s31
      %s25 = sphi 0, %s23
      %s26 = sphi 0, %s24
      %s27 = sphi 0, %s25
      %s28 = sphi 0, %s26
      %s40 = sphi 0, %s42
      %s43 = sphi 0, %s40
      %s44 = sphi 0, %s43
      %s60 = sphi 0, %s44
      %s68 = sphi 0, %s70
      %s71 = sphi 0, %s68
      %s72 = sphi 0, %s71
      %s88 = sphi 0, %s72
      %s94 = sphi 0, %s96
      %s97 = sphi 0, %s94
      %s98 = sphi 0, %s97
      %s114 = sphi 0, %s98
      %s120 = sphi 0, %s122
      %s123 = sphi 0, %s120
      %s124 = sphi 0, %s123
      %s140 = sphi 0, %s124
    $region4: #{tpu_custom_call.1} parent=1 // loop_header_branch
      %19 = sbr.rel (%p17) target = $region8
    $region5: #{tpu_custom_call.1} parent=1 // loop_body
      %s21 = ssub.s32 %s16, 1
      %s22 = ssub.s32 %s16, 2
      %s29 = sadd.s32 1, %s24
      %p30 = scmp.ge.s32.totalorder %s29, 1
      %s31 = scalar_select %p30, 0, %s29
      %s32 = sadd.s32 1, %s23
      %s33 = scalar_select %p30, %s32, %s23
      %p34 = scmp.ge.s32.totalorder %s33, 2
      %s35 = scalar_select %p34, 0, %s33
      %s36 = ssub.s32 %s23, %s35
      %s37 = ssub.s32 %s24, %s31
      %s38 = sor.u32 %s36, %s37
      %p39 = scmp.eq.s32.totalorder %s38, 0
      %s41 = sadd.s32 %s40, 1
      %s42 = scalar_select %p39, %s40, %s41
      %p45 = pneg %p39
      %p46 = scmp.eq.s32.totalorder %s16, 1
      %p47 = por %p45, %p46
      %p48 = scmp.ne.s32.totalorder %s40, %s43
      %p49 = scmp.eq.s32.totalorder %s16, 0
      %p50 = por %p48, %p49
      %p51 = scmp.ne.s32.totalorder %s40, %s43
      %p52 = scmp.eq.s32.totalorder %s21, 1
      %p53 = por %p51, %p52
      %p54 = scmp.ne.s32.totalorder %s43, %s44
      %p55 = scmp.eq.s32.totalorder %s21, 0
      %p56 = por %p54, %p55
      %p57 = scmp.ne.s32.totalorder %s43, %s44
      %p58 = scmp.eq.s32.totalorder %s22, 1
      %p59 = por %p57, %p58
      %p61 = scmp.ne.s32.totalorder %s44, %s60
      %p62 = scmp.eq.s32.totalorder %s22, 0
      %p63 = por %p61, %p62
      %s64 = ssub.s32 %s23, %s35
      %s65 = ssub.s32 %s24, %s31
      %s66 = sor.u32 %s64, %s65
      %p67 = scmp.eq.s32.totalorder %s66, 0
      %s69 = sadd.s32 %s68, 1
      %s70 = scalar_select %p67, %s68, %s69
      %p73 = pneg %p67
      %p74 = scmp.eq.s32.totalorder %s16, 1
      %p75 = por %p73, %p74
      %p76 = scmp.ne.s32.totalorder %s68, %s71
      %p77 = scmp.eq.s32.totalorder %s16, 0
      %p78 = por %p76, %p77
      %p79 = scmp.ne.s32.totalorder %s68, %s71
      %p80 = scmp.eq.s32.totalorder %s21, 1
      %p81 = por %p79, %p80
      %p82 = scmp.ne.s32.totalorder %s71, %s72
      %p83 = scmp.eq.s32.totalorder %s21, 0
      %p84 = por %p82, %p83
      %p85 = scmp.ne.s32.totalorder %s71, %s72
      %p86 = scmp.eq.s32.totalorder %s22, 1
      %p87 = por %p85, %p86
      %p89 = scmp.ne.s32.totalorder %s72, %s88
      %p90 = scmp.eq.s32.totalorder %s22, 0
      %p91 = por %p89, %p90
      %s92 = ssub.s32 %s23, %s35
      %p93 = scmp.eq.s32.totalorder %s92, 0
      %s95 = sadd.s32 %s94, 1
      %s96 = scalar_select %p93, %s94, %s95
      %p99 = pneg %p93
      %p100 = scmp.eq.s32.totalorder %s16, 1
      %p101 = por %p99, %p100
      %p102 = scmp.ne.s32.totalorder %s94, %s97
      %p103 = scmp.eq.s32.totalorder %s16, 0
      %p104 = por %p102, %p103
      %p105 = scmp.ne.s32.totalorder %s94, %s97
      %p106 = scmp.eq.s32.totalorder %s21, 1
      %p107 = por %p105, %p106
      %p108 = scmp.ne.s32.totalorder %s97, %s98
      %p109 = scmp.eq.s32.totalorder %s21, 0
      %p110 = por %p108, %p109
      %p111 = scmp.ne.s32.totalorder %s97, %s98
      %p112 = scmp.eq.s32.totalorder %s22, 1
      %p113 = por %p111, %p112
      %p115 = scmp.ne.s32.totalorder %s98, %s114
      %p116 = scmp.eq.s32.totalorder %s22, 0
      %p117 = por %p115, %p116
      %s118 = ssub.s32 %s23, %s35
      %p119 = scmp.eq.s32.totalorder %s118, 0
      %s121 = sadd.s32 %s120, 1
      %s122 = scalar_select %p119, %s120, %s121
      %p125 = pneg %p119
      %p126 = scmp.eq.s32.totalorder %s16, 1
      %p127 = por %p125, %p126
      %p128 = scmp.ne.s32.totalorder %s120, %s123
      %p129 = scmp.eq.s32.totalorder %s16, 0
      %p130 = por %p128, %p129
      %p131 = scmp.ne.s32.totalorder %s120, %s123
      %p132 = scmp.eq.s32.totalorder %s21, 1
      %p133 = por %p131, %p132
      %p134 = scmp.ne.s32.totalorder %s123, %s124
      %p135 = scmp.eq.s32.totalorder %s21, 0
      %p136 = por %p134, %p135
      %p137 = scmp.ne.s32.totalorder %s123, %s124
      %p138 = scmp.eq.s32.totalorder %s22, 1
      %p139 = por %p137, %p138
      %p141 = scmp.ne.s32.totalorder %s124, %s140
      %p142 = scmp.eq.s32.totalorder %s22, 0
      %p143 = por %p141, %p142
      %p144 = scmp.le.s32.totalorder 1, %s16
      %p145 = scmp.lt.s32.totalorder %s16, 3
      %p146 = pnand %p144, %p145
      %p147 = pneg %p146
      // Predicated region
      $region9: #{tpu_custom_call.1} parent=5 // pred_check
        _
      $region10: #{tpu_custom_call.1} parent=5 // pred_check_branch
        %149 = sbr.rel (%p146) target = $region12
      $region11: #{tpu_custom_call.1} parent=5 // pred_region
        %s150 = ssub.s32 %s16, 1
      $region12: #{tpu_custom_call.1} parent=5 // pred_fallthru
        _
      %p151 = scmp.lt.s32.totalorder %s16, 2
      // Predicated region
      $region13: #{tpu_custom_call.1} parent=5 // pred_check
        %p152 = pneg %p151
      $region14: #{tpu_custom_call.1} parent=5 // pred_check_branch
        %154 = sbr.rel (%p152) target = $region16
      $region15: #{tpu_custom_call.1} parent=5 // pred_region
        // Predicated region
        $region17: #{tpu_custom_call.1} parent=15 // pred_check
          %p155 = pneg %p50
        $region18: #{tpu_custom_call.1} parent=15 // pred_check_branch
          %157 = sbr.rel (%p155) target = $region20
        $region19: #{tpu_custom_call.1} parent=15 // pred_region
          %s158 = sand.u32 %s40, 1
          %s159 = scalar_lea.sflag [#allocation5], %s158
          %s160 = sand.u32 %s40, 1
          %s161 = smul.addr %s160, 8
          %s162 = scalar_lea.vmem [#allocation4], %s161
          %s164 = ssub.s32 128, 128
          %165 = vsyncadd %s159, %s164
          %s166 = smul.addr %s23, 4
          %s167 = sadd.s32 %s24, %s166
          %s168 = smul.addr %s167, 32
          %s169 = scalar_lea.hbm %s0, %s168
          %s170 = sshll.u32 %s162, 4
          %s171 = int_to_ptr.vmem [resolvable:$true] %s170
          %176 = dma.hbm_to_vmem [thread:$0]  %s169, 128, %s171, %s159, 32, 32, 2
        $region20: #{tpu_custom_call.1} parent=15 // pred_fallthru
          _
        // Predicated region
        $region21: #{tpu_custom_call.1} parent=15 // pred_check
          %p177 = pneg %p78
        $region22: #{tpu_custom_call.1} parent=15 // pred_check_branch
          %179 = sbr.rel (%p177) target = $region24
        $region23: #{tpu_custom_call.1} parent=15 // pred_region
          %s180 = sand.u32 %s68, 1
          %s181 = scalar_lea.sflag [#allocation7], %s180
          %s182 = sand.u32 %s68, 1
          %s183 = smul.addr %s182, 2
          %s184 = scalar_lea.vmem [#allocation6], %s183
          %s186 = ssub.s32 32, 32
          %187 = vsyncadd %s181, %s186
          %s188 = sadd.s32 %s24, %s23
          %s189 = smul.addr %s188, 32
          %s190 = scalar_lea.hbm %s1, %s189
          %s192 = sshll.u32 %s184, 4
          %s193 = int_to_ptr.vmem [resolvable:$true] %s192
          %195 = dma.hbm_to_vmem [thread:$0]  %s190, 32, %s193, %s181
        $region24: #{tpu_custom_call.1} parent=15 // pred_fallthru
          _
      $region16: #{tpu_custom_call.1} parent=5 // pred_fallthru
        _
      %p196 = scmp.le.s32.totalorder 1, %s16
      %p197 = scmp.lt.s32.totalorder %s16, 3
      %p198 = pnand %p196, %p197
      %p199 = pneg %p198
      // Predicated region
      $region25: #{tpu_custom_call.1} parent=5 // pred_check
        _
      $region26: #{tpu_custom_call.1} parent=5 // pred_check_branch
        %201 = sbr.rel (%p198) target = $region28
      $region27: #{tpu_custom_call.1} parent=5 // pred_region
        %s202 = ssub.s32 %s16, 1
        %s203 = sand.u32 %s43, 1
        %s204 = scalar_lea.sflag [#allocation5], %s203
        %s205 = sand.u32 %s43, 1
        %s206 = smul.addr %s205, 8
        %s207 = scalar_lea.vmem [#allocation4], %s206
        // Predicated region
        $region29: #{tpu_custom_call.1} parent=27 // pred_check
          %p208 = pneg %p56
        $region30: #{tpu_custom_call.1} parent=27 // pred_check_branch
          %210 = sbr.rel (%p208) target = $region32
        $region31: #{tpu_custom_call.1} parent=27 // pred_region
          %211 = dma.done %s204, 128
        $region32: #{tpu_custom_call.1} parent=27 // pred_fallthru
          _
        %s212 = sand.u32 %s71, 1
        %s213 = scalar_lea.sflag [#allocation7], %s212
        %s214 = sand.u32 %s71, 1
        %s215 = smul.addr %s214, 2
        %s216 = scalar_lea.vmem [#allocation6], %s215
        // Predicated region
        $region33: #{tpu_custom_call.1} parent=27 // pred_check
          %p217 = pneg %p84
        $region34: #{tpu_custom_call.1} parent=27 // pred_check_branch
          %219 = sbr.rel (%p217) target = $region36
        $region35: #{tpu_custom_call.1} parent=27 // pred_region
          %220 = dma.done %s213, 32
        $region36: #{tpu_custom_call.1} parent=27 // pred_fallthru
          _
        %s221 = sand.u32 %s43, 1
        %s222 = scalar_lea.sflag [#allocation5], %s221
        %s223 = sand.u32 %s43, 1
        %s224 = smul.addr %s223, 8
        %s225 = scalar_lea.vmem [#allocation4], %s224
        %p226 = pneg %p56
        %p227 = pneg %p53
        %s228 = sand.u32 %s71, 1
        %s229 = scalar_lea.sflag [#allocation7], %s228
        %s230 = sand.u32 %s71, 1
        %s231 = smul.addr %s230, 2
        %s232 = scalar_lea.vmem [#allocation6], %s231
        %p233 = pneg %p84
        %p234 = pneg %p81
        %p235 = pneg %p110
        %p236 = pneg %p107
        %p237 = scmp.lt.s32.totalorder %s25, 1
        %s238 = scalar_select %p237, %s25, 1
        %s239 = scalar_lea.vmem %s2, %s238
        %p240 = pneg %p136
        %p241 = pneg %p133
        %p242 = scmp.lt.s32.totalorder %s25, 1
        %s243 = scalar_select %p242, %s25, 1
        %s244 = scalar_lea.vmem %s3, %s243
        %p245 = scmp.lt.s32.totalorder %s25, 1
        %s246 = scalar_select %p245, %s25, 1
        %s247 = scalar_lea.vmem %s2, %s246
        %p248 = scmp.lt.s32.totalorder %s25, 1
        %s249 = scalar_select %p248, %s25, 1
        %s250 = scalar_lea.vmem %s3, %s249
        %p251 = scmp.eq.s32.totalorder %s26, 0
        // Predicated region
        $region37: #{tpu_custom_call.1} parent=27 // pred_check
          %p252 = pneg %p251
        $region38: #{tpu_custom_call.1} parent=27 // pred_check_branch
          %254 = sbr.rel (%p252) target = $region40
        $region39: #{tpu_custom_call.1} parent=27 // pred_region
          %255 = vst [vmem:[#allocation2] sm:$0x3] 0.0
          %256 = vst [vmem:[#allocation3] sm:$0x3] 0
        $region40: #{tpu_custom_call.1} parent=27 // pred_fallthru
          _
        %v257 = vld [vmem:[%s216] sm:$0x3]
        %vm258 = vcmp.ne.s32.totalorder %v257, 4294967196
        %v259 = vld [vmem:[%s207] sm:$0x3]
        %s260 = sadd.s32 0, 2
        %s261 = scalar_lea.vmem %s207, %s260 [#allocation4]
        %v262 = vld [vmem:[%s261] sm:$0x3]
        %v263 = vmax.f32 %v259, %v262
        %s264 = sadd.s32 0, 4
        %s265 = scalar_lea.vmem %s207, %s264 [#allocation4]
        %v266 = vld [vmem:[%s265] sm:$0x3]
        %v267 = vmax.f32 %v263, %v266
        %s268 = sadd.s32 0, 6
        %s269 = scalar_lea.vmem %s207, %s268 [#allocation4]
        %v270 = vld [vmem:[%s269] sm:$0x3]
        %v271 = vmax.f32 %v267, %v270
        %v272 = vsub.f32 %v259, %v271
        %v273 = vmul.f32 %v272, 1.442695
        %v274 = vpow.pop %v273
        %v275 = vadd.f32 %v274, 0.0
        %vm276 = vcmp.eq.s32.totalorder %v257, 0
        %v277 = vsel %vm276, %v259, 0.0
        %v278 = vsub.f32 %v262, %v271
        %v279 = vmul.f32 %v278, 1.442695
        %v280 = vpow.pop %v279
        %v281 = vadd.f32 %v275, %v280
        %vm282 = vcmp.eq.s32.totalorder %v257, 1
        %v283 = vsel %vm282, %v262, %v277
        %v284 = vsub.f32 %v266, %v271
        %v285 = vmul.f32 %v284, 1.442695
        %v286 = vpow.pop %v285
        %v287 = vadd.f32 %v281, %v286
        %vm288 = vcmp.eq.s32.totalorder %v257, 2
        %v289 = vsel %vm288, %v266, %v283
        %v290 = vsub.f32 %v270, %v271
        %v291 = vmul.f32 %v290, 1.442695
        %v292 = vpow.pop %v291
        %v293 = vadd.f32 %v287, %v292
        %vm294 = vcmp.eq.s32.totalorder %v257, 3
        %v295 = vsel %vm294, %v270, %v289
        %v296 = vlog2.pop %v293
        %v297 = vmul.f32 %v296, 0.6931472
        %v298 = vadd.f32 %v271, %v297
        %v299 = vsub.f32 %v298, %v295
        %v300 = vsel %vm258, %v299, 0.0
        %v301 = vld [vmem:[#allocation2] sm:$0x3]
        %v302 = vadd.f32 %v301, %v300
        %303 = vst [vmem:[#allocation2] sm:$0x3] %v302
        %v304 = vld [vmem:[#allocation3] sm:$0x3]
        %v305 = vsel %vm258, 1, 0
        %v306 = vadd.s32 %v304, %v305
        %307 = vst [vmem:[#allocation3] sm:$0x3] %v306
        // Predicated region
        $region41: #{tpu_custom_call.1} parent=27 // pred_check
          %p308 = pneg %p251
        $region42: #{tpu_custom_call.1} parent=27 // pred_check_branch
          %310 = sbr.rel (%p308) target = $region44
        $region43: #{tpu_custom_call.1} parent=27 // pred_region
          %v311 = vld [vmem:[#allocation2] sm:$0x3]
          %vm312 = vcmask 1041408
          %v313 = vsel %vm312, %v311, 0.0
          %314 = vadd.xlane.f32.xlu0 %v313
          %v315 = vpop.xlane.xlu0 %314
          %v316 = vrot.slane %v315, 4
          %v317 = vadd.f32 %v315, %v316
          %v318 = vrot.slane %v317, 2
          %v319 = vadd.f32 %v317, %v318
          %v320 = vrot.slane %v319, 1
          %v321 = vadd.f32 %v319, %v320
          %s322 = vtos %v321
          %v323 = vstv %s322
          %vm324 = vcmask 0
          %325 = vst.msk [vmem:[%s247] sm:$0x1] %vm324, %v323
          %v326 = vld [vmem:[#allocation3] sm:$0x3]
          %v327 = vsel %vm312, %v326, 0
          %v328 = vand.u32 %v327, 65535
          %v329 = vshrl.u32 %v327, 16
          %v330 = vcvt.s32.f32 %v328
          %v331 = vcvt.s32.f32 %v329
          %332 = vadd.xlane.f32.xlu0 %v330
          %v333 = vpop.xlane.xlu0 %332
          %334 = vadd.xlane.f32.xlu0 %v331
          %v335 = vpop.xlane.xlu0 %334
          %v336 = vcvt.f32.s32 %v333
          %v337 = vcvt.f32.s32 %v335
          %v338 = vshll.u32 %v337, 16
          %v339 = vadd.s32 %v338, %v336
          %v340 = vrot.slane %v339, 4
          %v341 = vadd.s32 %v339, %v340
          %v342 = vrot.slane %v341, 2
          %v343 = vadd.s32 %v341, %v342
          %v344 = vrot.slane %v343, 1
          %v345 = vadd.s32 %v343, %v344
          %s346 = vtos %v345
          %v347 = vstv %s346
          %348 = vst.msk [vmem:[%s250] sm:$0x1] %vm324, %v347
        $region44: #{tpu_custom_call.1} parent=27 // pred_fallthru
          _
        %p349 = scmp.lt.s32.totalorder %s25, 1
        %s350 = scalar_select %p349, %s25, 1
        %s351 = scalar_lea.vmem %s2, %s350
        %p352 = scmp.lt.s32.totalorder %s25, 1
        %s353 = scalar_select %p352, %s25, 1
        %s354 = scalar_lea.vmem %s3, %s353
        // Predicated region
        $region45: #{tpu_custom_call.1} parent=27 // pred_check
          %p355 = pneg %p107
        $region46: #{tpu_custom_call.1} parent=27 // pred_check_branch
          %357 = sbr.rel (%p355) target = $region48
        $region47: #{tpu_custom_call.1} parent=27 // pred_region
          _
        $region48: #{tpu_custom_call.1} parent=27 // pred_fallthru
          _
        // Predicated region
        $region49: #{tpu_custom_call.1} parent=27 // pred_check
          %p358 = pneg %p133
        $region50: #{tpu_custom_call.1} parent=27 // pred_check_branch
          %360 = sbr.rel (%p358) target = $region52
        $region51: #{tpu_custom_call.1} parent=27 // pred_region
          _
        $region52: #{tpu_custom_call.1} parent=27 // pred_fallthru
          _
      $region28: #{tpu_custom_call.1} parent=5 // pred_fallthru
        _
      %p361 = scmp.le.s32.totalorder 2, %s16
      // Predicated region
      $region53: #{tpu_custom_call.1} parent=5 // pred_check
        %p362 = pneg %p361
      $region54: #{tpu_custom_call.1} parent=5 // pred_check_branch
        %364 = sbr.rel (%p362) target = $region56
      $region55: #{tpu_custom_call.1} parent=5 // pred_region
        %s365 = ssub.s32 %s16, 2
        // Predicated region
        $region57: #{tpu_custom_call.1} parent=55 // pred_check
          %p366 = pneg %p113
        $region58: #{tpu_custom_call.1} parent=55 // pred_check_branch
          %368 = sbr.rel (%p366) target = $region60
        $region59: #{tpu_custom_call.1} parent=55 // pred_region
          %p369 = scmp.lt.s32.totalorder %s27, 1
          %s370 = scalar_select %p369, %s27, 1
          %s371 = scalar_lea.vmem %s2, %s370
        $region60: #{tpu_custom_call.1} parent=55 // pred_fallthru
          _
        // Predicated region
        $region61: #{tpu_custom_call.1} parent=55 // pred_check
          %p372 = pneg %p139
        $region62: #{tpu_custom_call.1} parent=55 // pred_check_branch
          %374 = sbr.rel (%p372) target = $region64
        $region63: #{tpu_custom_call.1} parent=55 // pred_region
          %p375 = scmp.lt.s32.totalorder %s27, 1
          %s376 = scalar_select %p375, %s27, 1
          %s377 = scalar_lea.vmem %s3, %s376
        $region64: #{tpu_custom_call.1} parent=55 // pred_fallthru
          _
      $region56: #{tpu_custom_call.1} parent=5 // pred_fallthru
        _
    $region6: #{tpu_custom_call.1} parent=1 // loop_footer
      %s20 = sadd.s32 1, %s16
    $region7: #{tpu_custom_call.1} parent=1 // loop_footer_branch
      %15 = sbr.rel target = $region3
    $region8: #{tpu_custom_call.1} parent=1 // loop_exit
      _
    %378 = vsyncpa [#allocation5], 1
    %s379 = scalar_lea.sflag [#allocation5], 1
    %380 = vsyncpa %s379, 1
    %381 = vsyncpa [#allocation7], 1
    %s382 = scalar_lea.sflag [#allocation7], 1
    %383 = vsyncpa %s382, 1

</llo_original>
